<compile_context>
chip_gen: v5e
topology: v5e:2x2
jax: 0.10.0
libtpu: 0.0.40
codegen_flags: <defaults>
</compile_context>

<pallas_src>
import numpy as np
import jax
import jax.numpy as jnp
from jax.experimental import pallas as pl
from jax.experimental.pallas import tpu as pltpu


def _identity_kernel(x_ref, o_ref):
    # The "forward" of the base backbone: pass features through unchanged.
    o_ref[...] = x_ref[...]


def _lane_dense_shape(shape):
    """Flatten NCHW so the last dim is lane-dense (multiple of 128) if possible."""
    n, c, h, w = shape
    total = n * c * h * w
    if w % 128 == 0:
        return (n * c * h, w)
    if (h * w) % 128 == 0:
        return (n * c, h * w)
    if total % 128 == 0:
        return (total // 128, 128)
    # TODO(synk): not 128-lane alignable; falls back to masked partial stores.
    return (n * c * h, w)


def _pick_tile_rows(rows, lanes, itemsize):
    """Bound per-block VMEM to ~2 MiB; round rows to the packed-sublane unit."""
    sub = max(8, 32 // max(1, itemsize))      # 8 for f32, 16 for bf16, 32 for int8
    budget = 2 * 1024 * 1024                  # bytes per block (x4 for dbl-buffered in+out)
    max_rows = max(sub, (budget // max(1, lanes * itemsize)) // sub * sub)
    if rows <= max_rows:
        return rows                            # single full-height block
    tr = max_rows
    while tr >= sub:
        if rows % tr == 0:
            return tr
        tr -= sub
    return min(rows, max_rows)                 # ragged last block (Pallas masks it)


_COPY_FN_CACHE = {}


def _get_copy_fn(rows, lanes, tile_rows, dtype):
    key = (rows, lanes, tile_rows, np.dtype(dtype).name)
    if key not in _COPY_FN_CACHE:
        grid = (pl.cdiv(rows, tile_rows),)
        call = pl.pallas_call(
            _identity_kernel,
            out_shape=jax.ShapeDtypeStruct((rows, lanes), dtype),
            grid_spec=pl.GridSpec(
                grid=grid,
                in_specs=[pl.BlockSpec((tile_rows, lanes), lambda i: (i, 0))],
                out_specs=pl.BlockSpec((tile_rows, lanes), lambda i: (i, 0)),
            ),
            # Alias input buffer to output buffer: no fresh HBM allocation,
            # and with jit donation the copy becomes (at most) read+write of
            # the same buffer rather than 2x-array traffic.
            input_output_aliases={0: 0},
            compiler_params=pltpu.CompilerParams(
                dimension_semantics=("parallel",),
            ),
        )
        _COPY_FN_CACHE[key] = jax.jit(call, donate_argnums=(0,))
    return _COPY_FN_CACHE[key]


def backbone_base_forward(x: jax.Array) -> jax.Array:
    """Pallas implementation of the (identity) base-backbone forward.

    x: NCHW tensor. Returns a tensor of identical shape/dtype.
    """
    n, c, h, w = x.shape
    rows, lanes = _lane_dense_shape(x.shape)
    tile_rows = _pick_tile_rows(rows, lanes, jnp.dtype(x.dtype).itemsize)

    x2d = x.reshape(rows, lanes)               # lane-dense 2D slab
    copy_fn = _get_copy_fn(rows, lanes, tile_rows, x.dtype)
    out2d = copy_fn(x2d)                       # x2d is donated; output aliases it

    return out2d.reshape(n, c, h, w)


class BackboneBase:
    """JAX/Pallas port of backbone_base."""

    def __init__(self, cfg):
        self._cfg = cfg
        self._feature_size = None

    def forward(self, x):
        return backbone_base_forward(x)

    def get_feature_size(self, _device=None):
        if self._feature_size is not None:
            return self._feature_size
        input_dim = (1,) + tuple(self._cfg["input_dim"])
        # Pure shape arithmetic: trace the forward abstractly, no device work.
        out = jax.eval_shape(
            self.forward, jax.ShapeDtypeStruct(input_dim, jnp.float32)
        )
        self._feature_size = int(np.prod(out.shape))
        return self._feature_size


if __name__ == "__main__":
    key = jax.random.PRNGKey(0)
    # Small NCHW input: batch=2, channels=4, spatial=16x16
    x = jax.random.normal(key, (2, 4, 16, 16), dtype=jnp.float32)

    cfg = {"input_dim": (4, 16, 16)}
    backbone = BackboneBase(cfg)

    y = backbone.forward(x)
    y = jax.block_until_ready(y)

    # Correctness: base-backbone forward is identity pass-through.
    assert y.shape == x.shape and y.dtype == x.dtype
    np.testing.assert_allclose(np.asarray(y), np.asarray(x), rtol=0, atol=0)

    # get_feature_size semantics: prod of output shape on a dummy input
    # (computed via shape tracing, no device execution).
    feat = backbone.get_feature_size()
    assert feat == int(np.prod((1, 4, 16, 16)))

    print("KERNEL_OK")
</pallas_src>

<mosaic_0001>
module attributes {stable_mosaic.version = 11 : i64} {
  func.func @_identity_kernel(%arg0: i32, %arg1: memref<8x256xf32, #tpu.memory_space<vmem>>, %arg2: memref<8x256xf32, #tpu.memory_space<vmem>>) attributes {dimension_semantics = [#tpu.dimension_semantics<parallel>], iteration_bounds = array<i64: 1>, scalar_prefetch = 0 : i64, scratch_operands = 0 : i64, tpu.core_type = #tpu.core_type<tc>, window_params = [{transform_indices = @transform_0, window_bounds = array<i64: 8, 256>}, {transform_indices = @transform_1, window_bounds = array<i64: 8, 256>}]} {
    %c0 = arith.constant 0 : index
    %c0_0 = arith.constant 0 : index
    %0 = vector.load %arg1[%c0, %c0_0] : memref<8x256xf32, #tpu.memory_space<vmem>>, vector<8x256xf32>
    %c0_1 = arith.constant 0 : index
    %c0_2 = arith.constant 0 : index
    %1 = vector.load %arg2[%c0_1, %c0_2] : memref<8x256xf32, #tpu.memory_space<vmem>>, vector<8x256xf32>
    tpu.vector_store %arg2[%c0_1, %c0_2], %0 {strides = array<i32>} : memref<8x256xf32, #tpu.memory_space<vmem>>, vector<8x256xf32>,
    return
  }
  func.func @transform_0(%arg0: i32) -> (i32, i32) {
    %c0_i32 = arith.constant 0 : i32
    %c0_i32_0 = arith.constant 0 : i32
    return %arg0, %c0_i32 : i32, i32
  }
  func.func @transform_1(%arg0: i32) -> (i32, i32) {
    %c0_i32 = arith.constant 0 : i32
    %c0_i32_0 = arith.constant 0 : i32
    return %arg0, %c0_i32 : i32, i32
  }
}

</mosaic_0001>

<llo_original>
// kernel: tpu_custom_call.1
$region0: #{tpu_custom_call.1}
  #allocation0 [shape = 'u32[]', space=smem, size = 0x4, offset = 0x4, fixed_abs, tag = 'smem constant byte address 0x4 - core index']
  #allocation1 [shape = 'u32[72,128]{1,0:T(1,128)}', space=vmem, size = 0x9000, scoped, tag = 'internal scratch']
  %s0 = inlined_call_operand.hbm [shape: f32[8,256], index: 0, kind: input, shape index: {}, may-alias: {0,1}]
  %s1 = inlined_call_operand.hbm [shape: f32[8,256], index: 1, kind: output, shape index: {}, may-alias: {0,1}]
  %s2 = sld [smem:[#allocation0]]
  $region18: #{tpu_custom_call.1} parent=0
    _
  %s4 = ssub.s32 1, %s2
  %s5 = scalar_select 0, %s4, %s2
  $region1: #{tpu_custom_call.1} parent=0
    #allocation2 [shape = 'u8[8192]{0}', space=vmem, size = 0x2000, scoped, tag = 'input window, operand 0, single buffered']
    #allocation3 [shape = 's32[1]{0}', space=sflag, size = 0x4, scoped, tag = 'scoped memory for tpu_custom_call.1']
    #allocation4 [shape = 's32[1]{0}', space=sflag, size = 0x4, scoped, tag = 'scoped memory for tpu_custom_call.1']
    #allocation5 [shape = 'u8[8192]{0}', space=vmem, size = 0x2000, scoped, tag = 'output window, operand 0, single buffered']
    %6 = vsyncpa [#allocation3], 0
    %7 = vsyncpa [#allocation4], 0
    // Predicated region
    $region2: #{tpu_custom_call.1} parent=1 // pred_check
      _
    $region3: #{tpu_custom_call.1} parent=1 // pred_check_branch
      %9 = sbr.rel (0) target = $region5
    $region4: #{tpu_custom_call.1} parent=1 // pred_region
      %11 = vsyncadd [#allocation3], 0
      %s13 = sshll.u32 %s0, 4
      %s14 = int_to_ptr.hbm [resolvable:$true] %s13
      %s15 = sshll.u32 [#allocation2], 4
      %s16 = int_to_ptr.vmem [resolvable:$true] %s15
      %18 = dma.hbm_to_vmem [thread:$0]  %s14, 256, %s16, [#allocation3]
    $region5: #{tpu_custom_call.1} parent=1 // pred_fallthru
      _
    // Predicated region
    $region6: #{tpu_custom_call.1} parent=1 // pred_check
      _
    $region7: #{tpu_custom_call.1} parent=1 // pred_check_branch
      %20 = sbr.rel (0) target = $region9
    $region8: #{tpu_custom_call.1} parent=1 // pred_region
      %22 = dma.done [#allocation3], 256
    $region9: #{tpu_custom_call.1} parent=1 // pred_fallthru
      _
    %v23 = vld [vmem:[#allocation2] sm:$0xff]
    %v24 = vld [vmem:[#allocation2 + $0x8] sm:$0xff]
    %25 = vst [vmem:[#allocation5] sm:$0xff] %v23
    %26 = vst [vmem:[#allocation5 + $0x8] sm:$0xff] %v24
    // Predicated region
    $region10: #{tpu_custom_call.1} parent=1 // pred_check
      _
    $region11: #{tpu_custom_call.1} parent=1 // pred_check_branch
      %28 = sbr.rel (0) target = $region13
    $region12: #{tpu_custom_call.1} parent=1 // pred_region
      %30 = vsyncadd [#allocation4], 0
      %s32 = sshll.u32 [#allocation5], 4
      %s33 = int_to_ptr.vmem [resolvable:$true] %s32
      %s34 = sshll.u32 %s1, 4
      %s35 = int_to_ptr.hbm [resolvable:$true] %s34
      %37 = dma.vmem_to_hbm [thread:$0]  %s33, 256, %s35, [#allocation4]
    $region13: #{tpu_custom_call.1} parent=1 // pred_fallthru
      _
    // Predicated region
    $region14: #{tpu_custom_call.1} parent=1 // pred_check
      _
    $region15: #{tpu_custom_call.1} parent=1 // pred_check_branch
      %39 = sbr.rel (0) target = $region17
    $region16: #{tpu_custom_call.1} parent=1 // pred_region
      %41 = dma.done [#allocation4], 256
    $region17: #{tpu_custom_call.1} parent=1 // pred_fallthru
      _
    %42 = vsyncpa [#allocation3], 1
    %43 = vsyncpa [#allocation4], 1

</llo_original>
